<compile_context>
chip_gen: v7x
topology: tpu7x:2x2x1
jax: 0.10.0
libtpu: 0.0.40
codegen_flags: <defaults>
</compile_context>

<pallas_src>
import jax
import jax.numpy as jnp
from jax.experimental import pallas as pl
from jax.experimental.pallas import tpu as pltpu


# ---------------- model config (matches module __init__ args) ----------------
ACTIVATION = "mish"
NUM_LAYERS = 3
IN_DIM = 768          # fixed by the module (Linear(768, hidden_dim))
HIDDEN_DIM = 64
NUM_LABELS = 5
DROPOUT_PR = 0.1      # inactive at inference -> identity

_LANE = 128
_SUBLANE = 8


def _round_up(x, m):
    return (x + m - 1) // m * m


def _mish(x):
    # mish(x) = x * tanh(softplus(x)); softplus computed stably via logaddexp.
    return x * jnp.tanh(jnp.logaddexp(x, 0.0))


def _cls_head_kernel(x_ref, w1_ref, b1_ref, w2_ref, b2_ref, w3_ref, b3_ref, out_ref):
    # Dense [TB, 768] CLS tile (CLS slice already done in the wrapper).
    x = x_ref[...].astype(jnp.float32)

    # Linear(768 -> hidden_dim) + Mish
    h1 = jnp.dot(x, w1_ref[...].astype(jnp.float32),
                 preferred_element_type=jnp.float32) + b1_ref[...]
    h1 = _mish(h1)

    # Linear(hidden_dim -> hidden_dim // 2) + Mish
    h2 = jnp.dot(h1, w2_ref[...].astype(jnp.float32),
                 preferred_element_type=jnp.float32) + b2_ref[...]
    h2 = _mish(h2)

    # Linear(hidden_dim // 2 -> num_labels_padded)   (padded columns are zero)
    logits = jnp.dot(h2, w3_ref[...].astype(jnp.float32),
                     preferred_element_type=jnp.float32) + b3_ref[...]
    out_ref[...] = logits.astype(out_ref.dtype)


def custom_roberta_cls_head(features, params, *, batch_tile=256):
    """features: [B, S, 768] (f32 or bf16); params: (in,out)-layout weights + (1,out) biases."""
    B, S, H = features.shape
    w1, b1, w2, b2, w3, b3 = (params["w1"], params["b1"], params["w2"],
                              params["b2"], params["w3"], params["b3"])
    h1 = w1.shape[1]
    h2 = w2.shape[1]
    nl = w3.shape[1]

    # --- CLS slice outside the kernel: only [B, 768] ever moves HBM -> VMEM. ---
    x = features[:, 0, :]

    # --- Pad logits dim to a full 128-lane block for unmasked dense stores. ---
    nl_pad = _round_up(nl, _LANE)
    w3p = jnp.pad(w3, ((0, 0), (0, nl_pad - nl)))   # padded columns are zero
    b3p = jnp.pad(b3, ((0, 0), (0, nl_pad - nl)))
    b1f = b1.astype(jnp.float32)
    b2f = b2.astype(jnp.float32)
    b3f = b3p.astype(jnp.float32)

    # --- Batch tiling: multiple of the f32 sublane (8), capped for VMEM friendliness. ---
    TB = batch_tile if B >= batch_tile else _round_up(B, _SUBLANE)
    B_pad = _round_up(B, TB)
    if B_pad != B:
        x = jnp.pad(x, ((0, B_pad - B), (0, 0)))
    grid = (B_pad // TB,)

    elt = jnp.dtype(x.dtype).itemsize
    cost = pl.CostEstimate(
        flops=2 * B_pad * (H * h1 + h1 * h2 + h2 * nl_pad),
        transcendentals=2 * B_pad * (h1 + h2),
        bytes_accessed=(B_pad * H * elt
                        + (H * h1 + h1 * h2 + h2 * nl_pad + h1 + h2 + nl_pad) * 4
                        + B_pad * nl_pad * 4),
    )

    out = pl.pallas_call(
        _cls_head_kernel,
        out_shape=jax.ShapeDtypeStruct((B_pad, nl_pad), jnp.float32),
        grid=grid,
        in_specs=[
            pl.BlockSpec((TB, H), lambda i: (i, 0)),        # CLS activations: tiled on batch
            pl.BlockSpec((H, h1), lambda i: (0, 0)),        # weights/biases: resident in VMEM
            pl.BlockSpec((1, h1), lambda i: (0, 0)),
            pl.BlockSpec((h1, h2), lambda i: (0, 0)),
            pl.BlockSpec((1, h2), lambda i: (0, 0)),
            pl.BlockSpec((h2, nl_pad), lambda i: (0, 0)),
            pl.BlockSpec((1, nl_pad), lambda i: (0, 0)),
        ],
        out_specs=pl.BlockSpec((TB, nl_pad), lambda i: (i, 0)),
        compiler_params=pltpu.CompilerParams(
            dimension_semantics=("parallel",)),
        cost_estimate=cost,
    )(x, w1, b1f, w2, b2f, w3p, b3f)

    return out[:B, :nl]


def _init_params(key):
    """Deterministic parameter init (synthetic; not a checkpoint load)."""
    k1, k2, k3, k4, k5, k6 = jax.random.split(key, 6)
    half = HIDDEN_DIM // 2
    scale1 = 1.0 / jnp.sqrt(IN_DIM)
    scale2 = 1.0 / jnp.sqrt(HIDDEN_DIM)
    scale3 = 1.0 / jnp.sqrt(half)
    return {
        "w1": jax.random.uniform(k1, (IN_DIM, HIDDEN_DIM), jnp.float32, -scale1, scale1),
        "b1": jax.random.uniform(k2, (1, HIDDEN_DIM), jnp.float32, -scale1, scale1),
        "w2": jax.random.uniform(k3, (HIDDEN_DIM, half), jnp.float32, -scale2, scale2),
        "b2": jax.random.uniform(k4, (1, half), jnp.float32, -scale2, scale2),
        "w3": jax.random.uniform(k5, (half, NUM_LABELS), jnp.float32, -scale3, scale3),
        "b3": jax.random.uniform(k6, (1, NUM_LABELS), jnp.float32, -scale3, scale3),
    }


def _reference(features, p):
    """Pure-JAX reference of the PyTorch forward (eval mode)."""
    x = features[:, 0, :].astype(jnp.float32)
    h1 = _mish(x @ p["w1"] + p["b1"])
    h2 = _mish(h1 @ p["w2"] + p["b2"])
    return h2 @ p["w3"] + p["b3"]


if __name__ == "__main__":
    key = jax.random.PRNGKey(0)
    k_feat, k_par = jax.random.split(key)

    B, S = 2, 8
    features = jax.random.normal(k_feat, (B, S, IN_DIM), jnp.float32)
    params = _init_params(k_par)

    out = custom_roberta_cls_head(features, params)
    out = jax.block_until_ready(out)

    ref = _reference(features, params)
    assert out.shape == (B, NUM_LABELS)
    assert jnp.allclose(out, ref, atol=1e-4, rtol=1e-4), "mismatch vs JAX reference"

    print("KERNEL_OK")
</pallas_src>

<mosaic_0001>
module attributes {stable_mosaic.version = 11 : i64} {
  func.func @_cls_head_kernel(%arg0: i32, %arg1: memref<8x768xf32, #tpu.memory_space<vmem>>, %arg2: memref<768x64xf32, #tpu.memory_space<vmem>>, %arg3: memref<1x64xf32, #tpu.memory_space<vmem>>, %arg4: memref<64x32xf32, #tpu.memory_space<vmem>>, %arg5: memref<1x32xf32, #tpu.memory_space<vmem>>, %arg6: memref<32x128xf32, #tpu.memory_space<vmem>>, %arg7: memref<1x128xf32, #tpu.memory_space<vmem>>, %arg8: memref<8x128xf32, #tpu.memory_space<vmem>>) attributes {dimension_semantics = [#tpu.dimension_semantics<parallel>], iteration_bounds = array<i64: 1>, scalar_prefetch = 0 : i64, scratch_operands = 0 : i64, tpu.core_type = #tpu.core_type<tc>, window_params = [{transform_indices = @transform_0, window_bounds = array<i64: 8, 768>}, {pipeline_mode = #tpu.pipeline_mode<synchronous>, transform_indices = @transform_1, window_bounds = array<i64: 768, 64>}, {pipeline_mode = #tpu.pipeline_mode<synchronous>, transform_indices = @transform_2, window_bounds = array<i64: 1, 64>}, {pipeline_mode = #tpu.pipeline_mode<synchronous>, transform_indices = @transform_3, window_bounds = array<i64: 64, 32>}, {pipeline_mode = #tpu.pipeline_mode<synchronous>, transform_indices = @transform_4, window_bounds = array<i64: 1, 32>}, {pipeline_mode = #tpu.pipeline_mode<synchronous>, transform_indices = @transform_5, window_bounds = array<i64: 32, 128>}, {pipeline_mode = #tpu.pipeline_mode<synchronous>, transform_indices = @transform_6, window_bounds = array<i64: 1, 128>}, {transform_indices = @transform_7, window_bounds = array<i64: 8, 128>}]} {
    %c0 = arith.constant 0 : index
    %c0_0 = arith.constant 0 : index
    %0 = vector.load %arg1[%c0, %c0_0] : memref<8x768xf32, #tpu.memory_space<vmem>>, vector<8x768xf32>
    %c0_1 = arith.constant 0 : index
    %c0_2 = arith.constant 0 : index
    %1 = vector.load %arg2[%c0_1, %c0_2] : memref<768x64xf32, #tpu.memory_space<vmem>>, vector<768x64xf32>
    %cst = arith.constant dense<0.000000e+00> : vector<8x64xf32>
    %2 = tpu.matmul %0, %1, %cst {dimension_numbers = #tpu.dot_dimension_numbers<[1], [0], [0], [1], [0, 0, 1, 1], [], []>} : vector<8x768xf32>, vector<768x64xf32>, vector<8x64xf32> -> vector<8x64xf32>
    %c0_3 = arith.constant 0 : index
    %c0_4 = arith.constant 0 : index
    %3 = vector.load %arg3[%c0_3, %c0_4] : memref<1x64xf32, #tpu.memory_space<vmem>>, vector<1x64xf32>
    %4 = vector.broadcast %3 : vector<1x64xf32> to vector<8x64xf32>
    %5 = arith.addf %2, %4 : vector<8x64xf32>
    %cst_5 = arith.constant 0.000000e+00 : f32
    %6 = vector.broadcast %cst_5 : f32 to vector<8x64xf32>
    %7 = arith.maximumf %5, %6 : vector<8x64xf32>
    %8 = vector.broadcast %cst_5 : f32 to vector<8x64xf32>
    %9 = arith.subf %5, %8 : vector<8x64xf32>
    %10 = arith.cmpf one, %9, %9 : vector<8x64xf32>
    %11 = vector.broadcast %cst_5 : f32 to vector<8x64xf32>
    %12 = arith.addf %5, %11 : vector<8x64xf32>
    %13 = math.absf %9 : vector<8x64xf32>
    %cst_6 = arith.constant 0.000000e+00 : f32
    %14 = vector.broadcast %cst_6 : f32 to vector<8x64xf32>
    %15 = arith.subf %14, %13 : vector<8x64xf32>
    %16 = math.exp %15 : vector<8x64xf32>
    %17 = math.log1p %16 : vector<8x64xf32>
    %18 = arith.addf %7, %17 : vector<8x64xf32>
    %19 = arith.select %10, %12, %18 : vector<8x64xi1>, vector<8x64xf32>
    %20 = math.tanh %19 : vector<8x64xf32>
    %21 = arith.mulf %5, %20 : vector<8x64xf32>
    %c0_7 = arith.constant 0 : index
    %c0_8 = arith.constant 0 : index
    %22 = vector.load %arg4[%c0_7, %c0_8] : memref<64x32xf32, #tpu.memory_space<vmem>>, vector<64x32xf32>
    %cst_9 = arith.constant dense<0.000000e+00> : vector<8x32xf32>
    %23 = tpu.matmul %21, %22, %cst_9 {dimension_numbers = #tpu.dot_dimension_numbers<[1], [0], [0], [1], [0, 0, 1, 1], [], []>} : vector<8x64xf32>, vector<64x32xf32>, vector<8x32xf32> -> vector<8x32xf32>
    %c0_10 = arith.constant 0 : index
    %c0_11 = arith.constant 0 : index
    %24 = vector.load %arg5[%c0_10, %c0_11] : memref<1x32xf32, #tpu.memory_space<vmem>>, vector<1x32xf32>
    %25 = vector.broadcast %24 : vector<1x32xf32> to vector<8x32xf32>
    %26 = arith.addf %23, %25 : vector<8x32xf32>
    %cst_12 = arith.constant 0.000000e+00 : f32
    %27 = vector.broadcast %cst_12 : f32 to vector<8x32xf32>
    %28 = arith.maximumf %26, %27 : vector<8x32xf32>
    %29 = vector.broadcast %cst_12 : f32 to vector<8x32xf32>
    %30 = arith.subf %26, %29 : vector<8x32xf32>
    %31 = arith.cmpf one, %30, %30 : vector<8x32xf32>
    %32 = vector.broadcast %cst_12 : f32 to vector<8x32xf32>
    %33 = arith.addf %26, %32 : vector<8x32xf32>
    %34 = math.absf %30 : vector<8x32xf32>
    %cst_13 = arith.constant 0.000000e+00 : f32
    %35 = vector.broadcast %cst_13 : f32 to vector<8x32xf32>
    %36 = arith.subf %35, %34 : vector<8x32xf32>
    %37 = math.exp %36 : vector<8x32xf32>
    %38 = math.log1p %37 : vector<8x32xf32>
    %39 = arith.addf %28, %38 : vector<8x32xf32>
    %40 = arith.select %31, %33, %39 : vector<8x32xi1>, vector<8x32xf32>
    %41 = math.tanh %40 : vector<8x32xf32>
    %42 = arith.mulf %26, %41 : vector<8x32xf32>
    %c0_14 = arith.constant 0 : index
    %c0_15 = arith.constant 0 : index
    %43 = vector.load %arg6[%c0_14, %c0_15] : memref<32x128xf32, #tpu.memory_space<vmem>>, vector<32x128xf32>
    %cst_16 = arith.constant dense<0.000000e+00> : vector<8x128xf32>
    %44 = tpu.matmul %42, %43, %cst_16 {dimension_numbers = #tpu.dot_dimension_numbers<[1], [0], [0], [1], [0, 0, 1, 1], [], []>} : vector<8x32xf32>, vector<32x128xf32>, vector<8x128xf32> -> vector<8x128xf32>
    %c0_17 = arith.constant 0 : index
    %c0_18 = arith.constant 0 : index
    %45 = vector.load %arg7[%c0_17, %c0_18] : memref<1x128xf32, #tpu.memory_space<vmem>>, vector<1x128xf32>
    %46 = vector.broadcast %45 : vector<1x128xf32> to vector<8x128xf32>
    %47 = arith.addf %44, %46 : vector<8x128xf32>
    %c0_19 = arith.constant 0 : index
    %c0_20 = arith.constant 0 : index
    %48 = vector.load %arg8[%c0_19, %c0_20] : memref<8x128xf32, #tpu.memory_space<vmem>>, vector<8x128xf32>
    tpu.vector_store %arg8[%c0_19, %c0_20], %47 {strides = array<i32>} : memref<8x128xf32, #tpu.memory_space<vmem>>, vector<8x128xf32>,
    return
  }
  func.func @transform_0(%arg0: i32) -> (i32, i32) {
    %c0_i32 = arith.constant 0 : i32
    %c0_i32_0 = arith.constant 0 : i32
    return %arg0, %c0_i32 : i32, i32
  }
  func.func @transform_1(%arg0: i32) -> (i32, i32) {
    %c0_i32 = arith.constant 0 : i32
    %c0_i32_0 = arith.constant 0 : i32
    %c0_i32_1 = arith.constant 0 : i32
    return %c0_i32, %c0_i32_0 : i32, i32
  }
  func.func @transform_2(%arg0: i32) -> (i32, i32) {
    %c0_i32 = arith.constant 0 : i32
    %c0_i32_0 = arith.constant 0 : i32
    %c0_i32_1 = arith.constant 0 : i32
    return %c0_i32, %c0_i32_0 : i32, i32
  }
  func.func @transform_3(%arg0: i32) -> (i32, i32) {
    %c0_i32 = arith.constant 0 : i32
    %c0_i32_0 = arith.constant 0 : i32
    %c0_i32_1 = arith.constant 0 : i32
    return %c0_i32, %c0_i32_0 : i32, i32
  }
  func.func @transform_4(%arg0: i32) -> (i32, i32) {
    %c0_i32 = arith.constant 0 : i32
    %c0_i32_0 = arith.constant 0 : i32
    %c0_i32_1 = arith.constant 0 : i32
    return %c0_i32, %c0_i32_0 : i32, i32
  }
  func.func @transform_5(%arg0: i32) -> (i32, i32) {
    %c0_i32 = arith.constant 0 : i32
    %c0_i32_0 = arith.constant 0 : i32
    %c0_i32_1 = arith.constant 0 : i32
    return %c0_i32, %c0_i32_0 : i32, i32
  }
  func.func @transform_6(%arg0: i32) -> (i32, i32) {
    %c0_i32 = arith.constant 0 : i32
    %c0_i32_0 = arith.constant 0 : i32
    %c0_i32_1 = arith.constant 0 : i32
    return %c0_i32, %c0_i32_0 : i32, i32
  }
  func.func @transform_7(%arg0: i32) -> (i32, i32) {
    %c0_i32 = arith.constant 0 : i32
    %c0_i32_0 = arith.constant 0 : i32
    return %arg0, %c0_i32 : i32, i32
  }
}

</mosaic_0001>

<llo_original>
// kernel: tpu_custom_call.1
$region0: #{tpu_custom_call.1}
  #allocation0 [shape = 'u32[]', space=smem, size = 0x4, offset = 0x4, fixed_abs, tag = 'smem constant byte address 0x4 - core index']
  #allocation1 [shape = 'u32[144,128]{1,0:T(1,128)}', space=vmem, size = 0x12000, scoped, tag = 'internal scratch']
  %s0 = inlined_call_operand.vmem [shape: f32[8,768], index: 0, kind: input, shape index: {}]
  %s1 = inlined_call_operand.vmem [shape: f32[768,64], index: 1, kind: input, shape index: {}]
  %s2 = inlined_call_operand.vmem [shape: f32[1,64], index: 2, kind: input, shape index: {}]
  %s3 = inlined_call_operand.vmem [shape: f32[64,32], index: 3, kind: input, shape index: {}]
  %s4 = inlined_call_operand.vmem [shape: f32[1,32], index: 4, kind: input, shape index: {}]
  %s5 = inlined_call_operand.vmem [shape: f32[32,128], index: 5, kind: input, shape index: {}]
  %s6 = inlined_call_operand.vmem [shape: f32[1,128], index: 6, kind: input, shape index: {}]
  %s7 = inlined_call_operand.hbm [shape: f32[8,128], index: 7, kind: output, shape index: {}]
  %s8 = sld [smem:[#allocation0]]
  $region38: #{tpu_custom_call.1} parent=0
    _
  %s10 = ssub.s32 1, %s8
  %s11 = scalar_select 0, %s10, %s8
  $region1: #{tpu_custom_call.1} parent=0
    #allocation2 [shape = 'u8[4096]{0}', space=vmem, size = 0x1000, scoped, tag = 'output window, operand 0, single buffered']
    #allocation3 [shape = 's32[1]{0}', space=sflag, size = 0x4, scoped, tag = 'scoped memory for tpu_custom_call.1']
    %12 = vsyncpa [#allocation3], 0
    // Predicated region
    $region2: #{tpu_custom_call.1} parent=1 // pred_check
      _
    $region3: #{tpu_custom_call.1} parent=1 // pred_check_branch
      %14 = sbr.rel (0) target = $region5
    $region4: #{tpu_custom_call.1} parent=1 // pred_region
      _
    $region5: #{tpu_custom_call.1} parent=1 // pred_fallthru
      _
    // Predicated region
    $region6: #{tpu_custom_call.1} parent=1 // pred_check
      _
    $region7: #{tpu_custom_call.1} parent=1 // pred_check_branch
      %16 = sbr.rel (0) target = $region9
    $region8: #{tpu_custom_call.1} parent=1 // pred_region
      _
    $region9: #{tpu_custom_call.1} parent=1 // pred_fallthru
      _
    // Predicated region
    $region10: #{tpu_custom_call.1} parent=1 // pred_check
      _
    $region11: #{tpu_custom_call.1} parent=1 // pred_check_branch
      %18 = sbr.rel (0) target = $region13
    $region12: #{tpu_custom_call.1} parent=1 // pred_region
      _
    $region13: #{tpu_custom_call.1} parent=1 // pred_fallthru
      _
    // Predicated region
    $region14: #{tpu_custom_call.1} parent=1 // pred_check
      _
    $region15: #{tpu_custom_call.1} parent=1 // pred_check_branch
      %20 = sbr.rel (0) target = $region17
    $region16: #{tpu_custom_call.1} parent=1 // pred_region
      _
    $region17: #{tpu_custom_call.1} parent=1 // pred_fallthru
      _
    // Predicated region
    $region18: #{tpu_custom_call.1} parent=1 // pred_check
      _
    $region19: #{tpu_custom_call.1} parent=1 // pred_check_branch
      %22 = sbr.rel (0) target = $region21
    $region20: #{tpu_custom_call.1} parent=1 // pred_region
      _
    $region21: #{tpu_custom_call.1} parent=1 // pred_fallthru
      _
    // Predicated region
    $region22: #{tpu_custom_call.1} parent=1 // pred_check
      _
    $region23: #{tpu_custom_call.1} parent=1 // pred_check_branch
      %24 = sbr.rel (0) target = $region25
    $region24: #{tpu_custom_call.1} parent=1 // pred_region
      _
    $region25: #{tpu_custom_call.1} parent=1 // pred_fallthru
      _
    // Predicated region
    $region26: #{tpu_custom_call.1} parent=1 // pred_check
      _
    $region27: #{tpu_custom_call.1} parent=1 // pred_check_branch
      %26 = sbr.rel (0) target = $region29
    $region28: #{tpu_custom_call.1} parent=1 // pred_region
      _
    $region29: #{tpu_custom_call.1} parent=1 // pred_fallthru
      _
    %v27 = vld [vmem:[%s0] sm:$0xff]
    %v28 = vld [vmem:[%s0 + $0x8] sm:$0xff]
    %v29 = vld [vmem:[%s0 + $0x10] sm:$0xff]
    %v30 = vld [vmem:[%s0 + $0x18] sm:$0xff]
    %v31 = vld [vmem:[%s0 + $0x20] sm:$0xff]
    %v32 = vld [vmem:[%s0 + $0x28] sm:$0xff]
    %v33 = vld [vmem:[%s1] sm:$0xff]
    %v34 = vld [vmem:[%s1 + $0x8] sm:$0xff]
    %v35 = vld [vmem:[%s1 + $0x10] sm:$0xff]
    %v36 = vld [vmem:[%s1 + $0x18] sm:$0xff]
    %v37 = vld [vmem:[%s1 + $0x20] sm:$0xff]
    %v38 = vld [vmem:[%s1 + $0x28] sm:$0xff]
    %v39 = vld [vmem:[%s1 + $0x30] sm:$0xff]
    %v40 = vld [vmem:[%s1 + $0x38] sm:$0xff]
    %v41 = vld [vmem:[%s1 + $0x40] sm:$0xff]
    %v42 = vld [vmem:[%s1 + $0x48] sm:$0xff]
    %v43 = vld [vmem:[%s1 + $0x50] sm:$0xff]
    %v44 = vld [vmem:[%s1 + $0x58] sm:$0xff]
    %v45 = vld [vmem:[%s1 + $0x60] sm:$0xff]
    %v46 = vld [vmem:[%s1 + $0x68] sm:$0xff]
    %v47 = vld [vmem:[%s1 + $0x70] sm:$0xff]
    %v48 = vld [vmem:[%s1 + $0x78] sm:$0xff]
    %v49 = vld [vmem:[%s1 + $0x80] sm:$0xff]
    %v50 = vld [vmem:[%s1 + $0x88] sm:$0xff]
    %v51 = vld [vmem:[%s1 + $0x90] sm:$0xff]
    %v52 = vld [vmem:[%s1 + $0x98] sm:$0xff]
    %v53 = vld [vmem:[%s1 + $0xa0] sm:$0xff]
    %v54 = vld [vmem:[%s1 + $0xa8] sm:$0xff]
    %v55 = vld [vmem:[%s1 + $0xb0] sm:$0xff]
    %v56 = vld [vmem:[%s1 + $0xb8] sm:$0xff]
    %v57 = vld [vmem:[%s1 + $0xc0] sm:$0xff]
    %v58 = vld [vmem:[%s1 + $0xc8] sm:$0xff]
    %v59 = vld [vmem:[%s1 + $0xd0] sm:$0xff]
    %v60 = vld [vmem:[%s1 + $0xd8] sm:$0xff]
    %v61 = vld [vmem:[%s1 + $0xe0] sm:$0xff]
    %v62 = vld [vmem:[%s1 + $0xe8] sm:$0xff]
    %v63 = vld [vmem:[%s1 + $0xf0] sm:$0xff]
    %v64 = vld [vmem:[%s1 + $0xf8] sm:$0xff]
    %v65 = vld [vmem:[%s1 + $0x100] sm:$0xff]
    %v66 = vld [vmem:[%s1 + $0x108] sm:$0xff]
    %v67 = vld [vmem:[%s1 + $0x110] sm:$0xff]
    %v68 = vld [vmem:[%s1 + $0x118] sm:$0xff]
    %v69 = vld [vmem:[%s1 + $0x120] sm:$0xff]
    %v70 = vld [vmem:[%s1 + $0x128] sm:$0xff]
    %v71 = vld [vmem:[%s1 + $0x130] sm:$0xff]
    %v72 = vld [vmem:[%s1 + $0x138] sm:$0xff]
    %v73 = vld [vmem:[%s1 + $0x140] sm:$0xff]
    %v74 = vld [vmem:[%s1 + $0x148] sm:$0xff]
    %v75 = vld [vmem:[%s1 + $0x150] sm:$0xff]
    %v76 = vld [vmem:[%s1 + $0x158] sm:$0xff]
    %v77 = vld [vmem:[%s1 + $0x160] sm:$0xff]
    %v78 = vld [vmem:[%s1 + $0x168] sm:$0xff]
    %v79 = vld [vmem:[%s1 + $0x170] sm:$0xff]
    %v80 = vld [vmem:[%s1 + $0x178] sm:$0xff]
    %v81 = vld [vmem:[%s1 + $0x180] sm:$0xff]
    %v82 = vld [vmem:[%s1 + $0x188] sm:$0xff]
    %v83 = vld [vmem:[%s1 + $0x190] sm:$0xff]
    %v84 = vld [vmem:[%s1 + $0x198] sm:$0xff]
    %v85 = vld [vmem:[%s1 + $0x1a0] sm:$0xff]
    %v86 = vld [vmem:[%s1 + $0x1a8] sm:$0xff]
    %v87 = vld [vmem:[%s1 + $0x1b0] sm:$0xff]
    %v88 = vld [vmem:[%s1 + $0x1b8] sm:$0xff]
    %v89 = vld [vmem:[%s1 + $0x1c0] sm:$0xff]
    %v90 = vld [vmem:[%s1 + $0x1c8] sm:$0xff]
    %v91 = vld [vmem:[%s1 + $0x1d0] sm:$0xff]
    %v92 = vld [vmem:[%s1 + $0x1d8] sm:$0xff]
    %v93 = vld [vmem:[%s1 + $0x1e0] sm:$0xff]
    %v94 = vld [vmem:[%s1 + $0x1e8] sm:$0xff]
    %v95 = vld [vmem:[%s1 + $0x1f0] sm:$0xff]
    %v96 = vld [vmem:[%s1 + $0x1f8] sm:$0xff]
    %v97 = vld [vmem:[%s1 + $0x200] sm:$0xff]
    %v98 = vld [vmem:[%s1 + $0x208] sm:$0xff]
    %v99 = vld [vmem:[%s1 + $0x210] sm:$0xff]
    %v100 = vld [vmem:[%s1 + $0x218] sm:$0xff]
    %v101 = vld [vmem:[%s1 + $0x220] sm:$0xff]
    %v102 = vld [vmem:[%s1 + $0x228] sm:$0xff]
    %v103 = vld [vmem:[%s1 + $0x230] sm:$0xff]
    %v104 = vld [vmem:[%s1 + $0x238] sm:$0xff]
    %v105 = vld [vmem:[%s1 + $0x240] sm:$0xff]
    %v106 = vld [vmem:[%s1 + $0x248] sm:$0xff]
    %v107 = vld [vmem:[%s1 + $0x250] sm:$0xff]
    %v108 = vld [vmem:[%s1 + $0x258] sm:$0xff]
    %v109 = vld [vmem:[%s1 + $0x260] sm:$0xff]
    %v110 = vld [vmem:[%s1 + $0x268] sm:$0xff]
    %v111 = vld [vmem:[%s1 + $0x270] sm:$0xff]
    %v112 = vld [vmem:[%s1 + $0x278] sm:$0xff]
    %v113 = vld [vmem:[%s1 + $0x280] sm:$0xff]
    %v114 = vld [vmem:[%s1 + $0x288] sm:$0xff]
    %v115 = vld [vmem:[%s1 + $0x290] sm:$0xff]
    %v116 = vld [vmem:[%s1 + $0x298] sm:$0xff]
    %v117 = vld [vmem:[%s1 + $0x2a0] sm:$0xff]
    %v118 = vld [vmem:[%s1 + $0x2a8] sm:$0xff]
    %v119 = vld [vmem:[%s1 + $0x2b0] sm:$0xff]
    %v120 = vld [vmem:[%s1 + $0x2b8] sm:$0xff]
    %v121 = vld [vmem:[%s1 + $0x2c0] sm:$0xff]
    %v122 = vld [vmem:[%s1 + $0x2c8] sm:$0xff]
    %v123 = vld [vmem:[%s1 + $0x2d0] sm:$0xff]
    %v124 = vld [vmem:[%s1 + $0x2d8] sm:$0xff]
    %v125 = vld [vmem:[%s1 + $0x2e0] sm:$0xff]
    %v126 = vld [vmem:[%s1 + $0x2e8] sm:$0xff]
    %v127 = vld [vmem:[%s1 + $0x2f0] sm:$0xff]
    %v128 = vld [vmem:[%s1 + $0x2f8] sm:$0xff]
    %v129 = vld [vmem:[%s2] sm:$0x1]
    %v131 = vlaneseq
    %v132 = vshrl.u32 %v131, 7
    %v133 = vsub.s32 0, %v132
    %v134 = vrot.slane %v129, %v133
    %136 = vmatprep.subr.mxu0 0.0
    %137 = vmatpush1.msra.mxu0 %v33
    %138 = vmatprep.subr.mxu0 0.0
    %139 = vmatpush1.msra.mxu0 %v34
    %140 = vmatprep.subr.mxu0 0.0
    %141 = vmatpush1.msra.mxu0 %v35
    %142 = vmatprep.subr.mxu0 0.0
    %143 = vmatpush1.msra.mxu0 %v36
    %144 = vmatprep.subr.mxu0 0.0
    %145 = vmatpush1.msra.mxu0 %v37
    %146 = vmatprep.subr.mxu0 0.0
    %147 = vmatpush1.msra.mxu0 %v38
    %148 = vmatprep.subr.mxu0 0.0
    %149 = vmatpush1.msra.mxu0 %v39
    %150 = vmatprep.subr.mxu0 0.0
    %151 = vmatpush1.msra.mxu0 %v40
    %152 = vmatprep.subr.mxu0 0.0
    %153 = vmatpush1.msra.mxu0 %v41
    %154 = vmatprep.subr.mxu0 0.0
    %155 = vmatpush1.msra.mxu0 %v42
    %156 = vmatprep.subr.mxu0 0.0
    %157 = vmatpush1.msra.mxu0 %v43
    %158 = vmatprep.subr.mxu0 0.0
    %159 = vmatpush1.msra.mxu0 %v44
    %160 = vmatprep.subr.mxu0 0.0
    %161 = vmatpush1.msra.mxu0 %v45
    %162 = vmatprep.subr.mxu0 0.0
    %163 = vmatpush1.msra.mxu0 %v46
    %164 = vmatprep.subr.mxu0 0.0
    %165 = vmatpush1.msra.mxu0 %v47
    %166 = vmatprep.subr.mxu0 0.0
    %167 = vmatpush1.msra.mxu0 %v48
    %168 = vmatprep.subr.mxu0 0.0
    %169 = vmatpush1.msra.mxu0 %v49
    %170 = vmatprep.subr.mxu0 0.0
    %171 = vmatpush1.msra.mxu0 %v50
    %172 = vmatprep.subr.mxu0 0.0
    %173 = vmatpush1.msra.mxu0 %v51
    %174 = vmatprep.subr.mxu0 0.0
    %175 = vmatpush1.msra.mxu0 %v52
    %176 = vmatprep.subr.mxu0 0.0
    %177 = vmatpush1.msra.mxu0 %v53
    %178 = vmatprep.subr.mxu0 0.0
    %179 = vmatpush1.msra.mxu0 %v54
    %180 = vmatprep.subr.mxu0 0.0
    %181 = vmatpush1.msra.mxu0 %v55
    %182 = vmatprep.subr.mxu0 0.0
    %183 = vmatpush1.msra.mxu0 %v56
    %184 = vmatprep.subr.mxu0 0.0
    %185 = vmatpush1.msra.mxu0 %v57
    %186 = vmatprep.subr.mxu0 0.0
    %187 = vmatpush1.msra.mxu0 %v58
    %188 = vmatprep.subr.mxu0 0.0
    %189 = vmatpush1.msra.mxu0 %v59
    %190 = vmatprep.subr.mxu0 0.0
    %191 = vmatpush1.msra.mxu0 %v60
    %192 = vmatprep.subr.mxu0 0.0
    %193 = vmatpush1.msra.mxu0 %v61
    %194 = vmatprep.subr.mxu0 0.0
    %195 = vmatpush1.msra.mxu0 %v62
    %196 = vmatprep.subr.mxu0 0.0
    %197 = vmatpush1.msra.mxu0 %v63
    %198 = vmatprep.subr.mxu0 0.0
    %199 = vmatpush1.msra.mxu0 %v64
    %200 = vmatprep.mubr.f32.mxu0 %v28
    %201 = vmatmul.mubr.f32.gmra.mrb[0].mxu0 %v27
    %v202 = vpop.f32.mrb[0].mxu0
    %v203 = vadd.f32 %v134, %v202
    %v204 = vpop.f32.mrb[0].mxu0
    %205 = vdwg.mxu0
    %206 = vmatprep.subr.mxu0 0.0
    %207 = vmatpush1.msra.mxu0 %v65
    %208 = vmatprep.subr.mxu0 0.0
    %209 = vmatpush1.msra.mxu0 %v66
    %210 = vmatprep.subr.mxu0 0.0
    %211 = vmatpush1.msra.mxu0 %v67
    %212 = vmatprep.subr.mxu0 0.0
    %213 = vmatpush1.msra.mxu0 %v68
    %214 = vmatprep.subr.mxu0 0.0
    %215 = vmatpush1.msra.mxu0 %v69
    %216 = vmatprep.subr.mxu0 0.0
    %217 = vmatpush1.msra.mxu0 %v70
    %218 = vmatprep.subr.mxu0 0.0
    %219 = vmatpush1.msra.mxu0 %v71
    %220 = vmatprep.subr.mxu0 0.0
    %221 = vmatpush1.msra.mxu0 %v72
    %222 = vmatprep.subr.mxu0 0.0
    %223 = vmatpush1.msra.mxu0 %v73
    %224 = vmatprep.subr.mxu0 0.0
    %225 = vmatpush1.msra.mxu0 %v74
    %226 = vmatprep.subr.mxu0 0.0
    %227 = vmatpush1.msra.mxu0 %v75
    %228 = vmatprep.subr.mxu0 0.0
    %229 = vmatpush1.msra.mxu0 %v76
    %230 = vmatprep.subr.mxu0 0.0
    %231 = vmatpush1.msra.mxu0 %v77
    %232 = vmatprep.subr.mxu0 0.0
    %233 = vmatpush1.msra.mxu0 %v78
    %234 = vmatprep.subr.mxu0 0.0
    %235 = vmatpush1.msra.mxu0 %v79
    %236 = vmatprep.subr.mxu0 0.0
    %237 = vmatpush1.msra.mxu0 %v80
    %238 = vmatprep.subr.mxu0 0.0
    %239 = vmatpush1.msra.mxu0 %v81
    %240 = vmatprep.subr.mxu0 0.0
    %241 = vmatpush1.msra.mxu0 %v82
    %242 = vmatprep.subr.mxu0 0.0
    %243 = vmatpush1.msra.mxu0 %v83
    %244 = vmatprep.subr.mxu0 0.0
    %245 = vmatpush1.msra.mxu0 %v84
    %246 = vmatprep.subr.mxu0 0.0
    %247 = vmatpush1.msra.mxu0 %v85
    %248 = vmatprep.subr.mxu0 0.0
    %249 = vmatpush1.msra.mxu0 %v86
    %250 = vmatprep.subr.mxu0 0.0
    %251 = vmatpush1.msra.mxu0 %v87
    %252 = vmatprep.subr.mxu0 0.0
    %253 = vmatpush1.msra.mxu0 %v88
    %254 = vmatprep.subr.mxu0 0.0
    %255 = vmatpush1.msra.mxu0 %v89
    %256 = vmatprep.subr.mxu0 0.0
    %257 = vmatpush1.msra.mxu0 %v90
    %258 = vmatprep.subr.mxu0 0.0
    %259 = vmatpush1.msra.mxu0 %v91
    %260 = vmatprep.subr.mxu0 0.0
    %261 = vmatpush1.msra.mxu0 %v92
    %262 = vmatprep.subr.mxu0 0.0
    %263 = vmatpush1.msra.mxu0 %v93
    %264 = vmatprep.subr.mxu0 0.0
    %265 = vmatpush1.msra.mxu0 %v94
    %266 = vmatprep.subr.mxu0 0.0
    %267 = vmatpush1.msra.mxu0 %v95
    %268 = vmatprep.subr.mxu0 0.0
    %269 = vmatpush1.msra.mxu0 %v96
    %270 = vmatprep.mubr.f32.mxu0 %v30
    %271 = vmatmul.mubr.f32.gmra.mrb[0].mxu0 %v29
    %v272 = vpop.f32.mrb[0].mxu0
    %v273 = vadd.f32 %v203, %v272
    %v274 = vpop.f32.mrb[0].mxu0
    %275 = vdwg.mxu0
    %276 = vmatprep.subr.mxu0 0.0
    %277 = vmatpush1.msra.mxu0 %v97
    %278 = vmatprep.subr.mxu0 0.0
    %279 = vmatpush1.msra.mxu0 %v98
    %280 = vmatprep.subr.mxu0 0.0
    %281 = vmatpush1.msra.mxu0 %v99
    %282 = vmatprep.subr.mxu0 0.0
    %283 = vmatpush1.msra.mxu0 %v100
    %284 = vmatprep.subr.mxu0 0.0
    %285 = vmatpush1.msra.mxu0 %v101
    %286 = vmatprep.subr.mxu0 0.0
    %287 = vmatpush1.msra.mxu0 %v102
    %288 = vmatprep.subr.mxu0 0.0
    %289 = vmatpush1.msra.mxu0 %v103
    %290 = vmatprep.subr.mxu0 0.0
    %291 = vmatpush1.msra.mxu0 %v104
    %292 = vmatprep.subr.mxu0 0.0
    %293 = vmatpush1.msra.mxu0 %v105
    %294 = vmatprep.subr.mxu0 0.0
    %295 = vmatpush1.msra.mxu0 %v106
    %296 = vmatprep.subr.mxu0 0.0
    %297 = vmatpush1.msra.mxu0 %v107
    %298 = vmatprep.subr.mxu0 0.0
    %299 = vmatpush1.msra.mxu0 %v108
    %300 = vmatprep.subr.mxu0 0.0
    %301 = vmatpush1.msra.mxu0 %v109
    %302 = vmatprep.subr.mxu0 0.0
    %303 = vmatpush1.msra.mxu0 %v110
    %304 = vmatprep.subr.mxu0 0.0
    %305 = vmatpush1.msra.mxu0 %v111
    %306 = vmatprep.subr.mxu0 0.0
    %307 = vmatpush1.msra.mxu0 %v112
    %308 = vmatprep.subr.mxu0 0.0
    %309 = vmatpush1.msra.mxu0 %v113
    %310 = vmatprep.subr.mxu0 0.0
    %311 = vmatpush1.msra.mxu0 %v114
    %312 = vmatprep.subr.mxu0 0.0
    %313 = vmatpush1.msra.mxu0 %v115
    %314 = vmatprep.subr.mxu0 0.0
    %315 = vmatpush1.msra.mxu0 %v116
    %316 = vmatprep.subr.mxu0 0.0
    %317 = vmatpush1.msra.mxu0 %v117
    %318 = vmatprep.subr.mxu0 0.0
    %319 = vmatpush1.msra.mxu0 %v118
    %320 = vmatprep.subr.mxu0 0.0
    %321 = vmatpush1.msra.mxu0 %v119
    %322 = vmatprep.subr.mxu0 0.0
    %323 = vmatpush1.msra.mxu0 %v120
    %324 = vmatprep.subr.mxu0 0.0
    %325 = vmatpush1.msra.mxu0 %v121
    %326 = vmatprep.subr.mxu0 0.0
    %327 = vmatpush1.msra.mxu0 %v122
    %328 = vmatprep.subr.mxu0 0.0
    %329 = vmatpush1.msra.mxu0 %v123
    %330 = vmatprep.subr.mxu0 0.0
    %331 = vmatpush1.msra.mxu0 %v124
    %332 = vmatprep.subr.mxu0 0.0
    %333 = vmatpush1.msra.mxu0 %v125
    %334 = vmatprep.subr.mxu0 0.0
    %335 = vmatpush1.msra.mxu0 %v126
    %336 = vmatprep.subr.mxu0 0.0
    %337 = vmatpush1.msra.mxu0 %v127
    %338 = vmatprep.subr.mxu0 0.0
    %339 = vmatpush1.msra.mxu0 %v128
    %340 = vmatprep.mubr.f32.mxu0 %v32
    %341 = vmatmul.mubr.f32.gmra.mrb[0].mxu0 %v31
    %v342 = vpop.f32.mrb[0].mxu0
    %v343 = vadd.f32 %v273, %v342
    %v344 = vpop.f32.mrb[0].mxu0
    %345 = vdwg.mxu0
    %v346 = vmax.f32 %v343, 0.0
    %vm347 = vcmp.ne.f32.partialorder %v343, %v343
    %v348 = vadd.f32 %v343, 0.0
    %v349 = vand.u32 2147483647, %v343
    %v350 = vsub.f32 0.0, %v349
    %v351 = vmul.f32 %v350, 1.442695
    %v352 = vpow.pop %v351
    %v353 = vadd.f32 %v352, 1.0
    %v354 = vlog2.pop %v353
    %v355 = vmul.f32 %v354, 0.6931472
    %v356 = vmul.f32 -0.5, %v352
    %v357 = vadd.f32 %v356, 1.0
    %v358 = vmul.f32 %v357, %v352
    %v359 = vand.u32 2147483647, %v352
    %vm360 = vcmp.lt.f32.partialorder %v359, 0.0004427343
    %v361 = vsel %vm360, %v358, %v355
    %v362 = vadd.f32 %v346, %v361
    %v363 = vsel %vm347, %v348, %v362
    %v364 = vtanh.pop %v363
    %v365 = vmul.f32 %v343, %v364
    %v366 = vld [vmem:[%s3] sm:$0xff]
    %v367 = vld [vmem:[%s3 + $0x8] sm:$0xff]
    %v368 = vld [vmem:[%s3 + $0x10] sm:$0xff]
    %v369 = vld [vmem:[%s3 + $0x18] sm:$0xff]
    %v370 = vld [vmem:[%s3 + $0x20] sm:$0xff]
    %v371 = vld [vmem:[%s3 + $0x28] sm:$0xff]
    %v372 = vld [vmem:[%s3 + $0x30] sm:$0xff]
    %v373 = vld [vmem:[%s3 + $0x38] sm:$0xff]
    %v374 = vld [vmem:[%s4] sm:$0x1]
    %v376 = vlaneseq
    %v377 = vshrl.u32 %v376, 7
    %v378 = vsub.s32 0, %v377
    %v379 = vrot.slane %v374, %v378
    %vm381 = vcmask 523264
    %v383 = vsel %vm381, %v365, 0
    %385 = vmatprep.subr.mxu0 0.0
    %386 = vmatpush1.msra.mxu0 %v366
    %387 = vmatprep.subr.mxu0 0.0
    %388 = vmatpush1.msra.mxu0 %v367
    %389 = vmatprep.subr.mxu0 0.0
    %390 = vmatpush1.msra.mxu0 %v368
    %391 = vmatprep.subr.mxu0 0.0
    %392 = vmatpush1.msra.mxu0 %v369
    %393 = vmatprep.subr.mxu0 0.0
    %394 = vmatpush1.msra.mxu0 %v370
    %395 = vmatprep.subr.mxu0 0.0
    %396 = vmatpush1.msra.mxu0 %v371
    %397 = vmatprep.subr.mxu0 0.0
    %398 = vmatpush1.msra.mxu0 %v372
    %399 = vmatprep.subr.mxu0 0.0
    %400 = vmatpush1.msra.mxu0 %v373
    %401 = vmatprep.subr.mxu0 0.0
    %402 = vmatpush1.msra.mxu0 0.0
    %403 = vmatprep.subr.mxu0 0.0
    %404 = vmatpush1.msra.mxu0 0.0
    %405 = vmatprep.subr.mxu0 0.0
    %406 = vmatpush1.msra.mxu0 0.0
    %407 = vmatprep.subr.mxu0 0.0
    %408 = vmatpush1.msra.mxu0 0.0
    %409 = vmatprep.subr.mxu0 0.0
    %410 = vmatpush1.msra.mxu0 0.0
    %411 = vmatprep.subr.mxu0 0.0
    %412 = vmatpush1.msra.mxu0 0.0
    %413 = vmatprep.subr.mxu0 0.0
    %414 = vmatpush1.msra.mxu0 0.0
    %415 = vmatprep.subr.mxu0 0.0
    %416 = vmatpush1.msra.mxu0 0.0
    %417 = vmatprep.subr.mxu0 0.0
    %418 = vmatpush1.msra.mxu0 0.0
    %419 = vmatprep.subr.mxu0 0.0
    %420 = vmatpush1.msra.mxu0 0.0
    %421 = vmatprep.subr.mxu0 0.0
    %422 = vmatpush1.msra.mxu0 0.0
    %423 = vmatprep.subr.mxu0 0.0
    %424 = vmatpush1.msra.mxu0 0.0
    %425 = vmatprep.subr.mxu0 0.0
    %426 = vmatpush1.msra.mxu0 0.0
    %427 = vmatprep.subr.mxu0 0.0
    %428 = vmatpush1.msra.mxu0 0.0
    %429 = vmatprep.subr.mxu0 0.0
    %430 = vmatpush1.msra.mxu0 0.0
    %431 = vmatprep.subr.mxu0 0.0
    %432 = vmatpush1.msra.mxu0 0.0
    %433 = vmatprep.subr.mxu0 0.0
    %434 = vmatpush1.msra.mxu0 0.0
    %435 = vmatprep.subr.mxu0 0.0
    %436 = vmatpush1.msra.mxu0 0.0
    %437 = vmatprep.subr.mxu0 0.0
    %438 = vmatpush1.msra.mxu0 0.0
    %439 = vmatprep.subr.mxu0 0.0
    %440 = vmatpush1.msra.mxu0 0.0
    %441 = vmatprep.subr.mxu0 0.0
    %442 = vmatpush1.msra.mxu0 0.0
    %443 = vmatprep.subr.mxu0 0.0
    %444 = vmatpush1.msra.mxu0 0.0
    %445 = vmatprep.subr.mxu0 0.0
    %446 = vmatpush1.msra.mxu0 0.0
    %447 = vmatprep.subr.mxu0 0.0
    %448 = vmatpush1.msra.mxu0 0.0
    %449 = vmatprep.mubr.f32.mxu0 0.0
    %450 = vmatmul.mubr.f32.gmra.mrb[0].mxu0 %v383
    %v451 = vpop.f32.mrb[0].mxu0
    %v452 = vadd.f32 %v379, %v451
    %v453 = vpop.f32.mrb[0].mxu0
    %454 = vdwg.mxu0
    %v455 = vmax.f32 %v452, 0.0
    %vm456 = vcmp.ne.f32.partialorder %v452, %v452
    %v457 = vadd.f32 %v452, 0.0
    %v458 = vand.u32 2147483647, %v452
    %v459 = vsub.f32 0.0, %v458
    %v460 = vmul.f32 %v459, 1.442695
    %v461 = vpow.pop %v460
    %v462 = vadd.f32 %v461, 1.0
    %v463 = vlog2.pop %v462
    %v464 = vmul.f32 %v463, 0.6931472
    %v465 = vmul.f32 -0.5, %v461
    %v466 = vadd.f32 %v465, 1.0
    %v467 = vmul.f32 %v466, %v461
    %v468 = vand.u32 2147483647, %v461
    %vm469 = vcmp.lt.f32.partialorder %v468, 0.0004427343
    %v470 = vsel %vm469, %v467, %v464
    %v471 = vadd.f32 %v455, %v470
    %v472 = vsel %vm456, %v457, %v471
    %v473 = vtanh.pop %v472
    %v474 = vmul.f32 %v452, %v473
    %v475 = vld [vmem:[%s5] sm:$0xff]
    %v476 = vld [vmem:[%s5 + $0x8] sm:$0xff]
    %v477 = vld [vmem:[%s5 + $0x10] sm:$0xff]
    %v478 = vld [vmem:[%s5 + $0x18] sm:$0xff]
    %v479 = vld [vmem:[%s6] sm:$0x1]
    %v481 = vlaneseq
    %v482 = vshrl.u32 %v481, 7
    %v483 = vsub.s32 0, %v482
    %v484 = vrot.slane %v479, %v483
    %vm486 = vcmask 261120
    %v488 = vsel %vm486, %v474, 0
    %490 = vmatprep.subr.mxu0 0.0
    %491 = vmatpush1.msra.mxu0 %v475
    %492 = vmatprep.subr.mxu0 0.0
    %493 = vmatpush1.msra.mxu0 %v476
    %494 = vmatprep.subr.mxu0 0.0
    %495 = vmatpush1.msra.mxu0 %v477
    %496 = vmatprep.subr.mxu0 0.0
    %497 = vmatpush1.msra.mxu0 %v478
    %498 = vmatprep.subr.mxu0 0.0
    %499 = vmatpush1.msra.mxu0 0.0
    %500 = vmatprep.subr.mxu0 0.0
    %501 = vmatpush1.msra.mxu0 0.0
    %502 = vmatprep.subr.mxu0 0.0
    %503 = vmatpush1.msra.mxu0 0.0
    %504 = vmatprep.subr.mxu0 0.0
    %505 = vmatpush1.msra.mxu0 0.0
    %506 = vmatprep.subr.mxu0 0.0
    %507 = vmatpush1.msra.mxu0 0.0
    %508 = vmatprep.subr.mxu0 0.0
    %509 = vmatpush1.msra.mxu0 0.0
    %510 = vmatprep.subr.mxu0 0.0
    %511 = vmatpush1.msra.mxu0 0.0
    %512 = vmatprep.subr.mxu0 0.0
    %513 = vmatpush1.msra.mxu0 0.0
    %514 = vmatprep.subr.mxu0 0.0
    %515 = vmatpush1.msra.mxu0 0.0
    %516 = vmatprep.subr.mxu0 0.0
    %517 = vmatpush1.msra.mxu0 0.0
    %518 = vmatprep.subr.mxu0 0.0
    %519 = vmatpush1.msra.mxu0 0.0
    %520 = vmatprep.subr.mxu0 0.0
    %521 = vmatpush1.msra.mxu0 0.0
    %522 = vmatprep.subr.mxu0 0.0
    %523 = vmatpush1.msra.mxu0 0.0
    %524 = vmatprep.subr.mxu0 0.0
    %525 = vmatpush1.msra.mxu0 0.0
    %526 = vmatprep.subr.mxu0 0.0
    %527 = vmatpush1.msra.mxu0 0.0
    %528 = vmatprep.subr.mxu0 0.0
    %529 = vmatpush1.msra.mxu0 0.0
    %530 = vmatprep.subr.mxu0 0.0
    %531 = vmatpush1.msra.mxu0 0.0
    %532 = vmatprep.subr.mxu0 0.0
    %533 = vmatpush1.msra.mxu0 0.0
    %534 = vmatprep.subr.mxu0 0.0
    %535 = vmatpush1.msra.mxu0 0.0
    %536 = vmatprep.subr.mxu0 0.0
    %537 = vmatpush1.msra.mxu0 0.0
    %538 = vmatprep.subr.mxu0 0.0
    %539 = vmatpush1.msra.mxu0 0.0
    %540 = vmatprep.subr.mxu0 0.0
    %541 = vmatpush1.msra.mxu0 0.0
    %542 = vmatprep.subr.mxu0 0.0
    %543 = vmatpush1.msra.mxu0 0.0
    %544 = vmatprep.subr.mxu0 0.0
    %545 = vmatpush1.msra.mxu0 0.0
    %546 = vmatprep.subr.mxu0 0.0
    %547 = vmatpush1.msra.mxu0 0.0
    %548 = vmatprep.subr.mxu0 0.0
    %549 = vmatpush1.msra.mxu0 0.0
    %550 = vmatprep.subr.mxu0 0.0
    %551 = vmatpush1.msra.mxu0 0.0
    %552 = vmatprep.subr.mxu0 0.0
    %553 = vmatpush1.msra.mxu0 0.0
    %554 = vmatprep.mubr.f32.mxu0 0.0
    %555 = vmatmul.mubr.f32.gmra.mrb[0].mxu0 %v488
    %v556 = vpop.f32.mrb[0].mxu0
    %v557 = vadd.f32 %v484, %v556
    %v558 = vpop.f32.mrb[0].mxu0
    %559 = vdwg.mxu0
    %560 = vst [vmem:[#allocation2] sm:$0xff] %v557
    // Predicated region
    $region30: #{tpu_custom_call.1} parent=1 // pred_check
      _
    $region31: #{tpu_custom_call.1} parent=1 // pred_check_branch
      %562 = sbr.rel (0) target = $region33
    $region32: #{tpu_custom_call.1} parent=1 // pred_region
      %s564 = ssub.s32 128, 128
      %565 = vsyncadd [#allocation3], %s564
      %s567 = sshll.u32 [#allocation2], 4
      %s568 = int_to_ptr.vmem [resolvable:$true] %s567
      %570 = dma.vmem_to_hbm [thread:$0]  %s568, 128, %s7, [#allocation3]
    $region33: #{tpu_custom_call.1} parent=1 // pred_fallthru
      _
    // Predicated region
    $region34: #{tpu_custom_call.1} parent=1 // pred_check
      _
    $region35: #{tpu_custom_call.1} parent=1 // pred_check_branch
      %572 = sbr.rel (0) target = $region37
    $region36: #{tpu_custom_call.1} parent=1 // pred_region
      %573 = dma.done [#allocation3], 128
    $region37: #{tpu_custom_call.1} parent=1 // pred_fallthru
      _
    %574 = vsyncpa [#allocation3], 1

</llo_original>
